<compile_context>
chip_gen: v7x
topology: tpu7x:2x2x1
jax: 0.10.0
libtpu: 0.0.40
codegen_flags: <defaults>
</compile_context>

<pallas_src>
import functools

import jax
import jax.numpy as jnp
from jax.experimental import pallas as pl
from jax.experimental.pallas import tpu as pltpu

_LANE = 128
_SUBLANE = 8
_MAX_TILE_ROWS = 1024   # 1024x128 f32 = 512 KiB per block; plateau of HBM roofline
_NUM_CORES = 2          # megacore split on v7x; harmless on 1-TC chips


def _make_dice_kernel(has_weights, rows_total, tile_rows, blocks_per_core, need_mask):
    """Builds the kernel body. All args are Python/static."""

    def kernel(*refs):
        if has_weights:
            p_ref, g_ref, m_ref, w_ref, acc_ref = refs
        else:
            p_ref, g_ref, m_ref, acc_ref = refs
            w_ref = None

        c = pl.program_id(0)   # core / parallel axis
        k = pl.program_id(1)   # reduction axis

        @pl.when(k == 0)
        def _init():
            acc_ref[...] = jnp.zeros_like(acc_ref)

        # Loads stay at native dtype; compute/accumulate in f32.
        p = p_ref[...].astype(jnp.float32)
        g = g_ref[...].astype(jnp.float32)
        m = m_ref[...].astype(jnp.float32)
        if has_weights:
            m = m * w_ref[...].astype(jnp.float32)

        if need_mask:
            # Overhanging / overflow block: zero out rows past the logical end.
            # jnp.where (not multiply) so unspecified OOB garbage (incl. NaN/Inf)
            # never reaches the accumulators.
            base = (c * blocks_per_core + k) * tile_rows
            row_ids = base + jax.lax.broadcasted_iota(jnp.int32, (tile_rows, 1), 0)
            valid = row_ids < rows_total
            p = jnp.where(valid, p, 0.0)
            g = jnp.where(valid, g, 0.0)
            m = jnp.where(valid, m, 0.0)

        pm = p * m          # reused for intersection and pred-sum
        gm = g * m
        inter = pm * g

        # Vreg-wise accumulation (VPU adds only, no cross-lane XLU work in the
        # hot loop): fold tile rows into (8, 128) partial bins.
        def fold(x):
            return x.reshape(-1, _SUBLANE, _LANE).sum(axis=0)

        acc_ref[0, :, :] += fold(inter)
        acc_ref[1, :, :] += fold(pm)
        acc_ref[2, :, :] += fold(gm)

    return kernel


def _flatten_lanes(x, padded_elems):
    """Flatten to a (rows, 128) lane-dense slab. Free (bitcast-style reshape)
    unless a zero-pad is required for odd element counts."""
    flat = x.reshape(-1)
    if flat.size != padded_elems:
        flat = jnp.pad(flat, (0, padded_elems - flat.size))
    return flat.reshape(-1, _LANE)


@functools.partial(jax.jit, static_argnames=("eps",))
def _dice_loss_impl(p, g, m, weights, eps):
    has_weights = weights is not None

    n_elem = p.size
    chunk = _SUBLANE * _LANE
    padded = ((n_elem + chunk - 1) // chunk) * chunk  # keeps rows a multiple of 8
    rows = padded // _LANE

    inputs = [p, g, m] + ([weights] if has_weights else [])
    slabs = [_flatten_lanes(x, padded) for x in inputs]

    tile_rows = min(_MAX_TILE_ROWS, rows)             # both multiples of 8
    num_blocks = pl.cdiv(rows, tile_rows)
    num_cores = _NUM_CORES if num_blocks >= _NUM_CORES else 1
    blocks_per_core = pl.cdiv(num_blocks, num_cores)
    need_mask = (num_cores * blocks_per_core * tile_rows) != rows

    def in_map(c, k):
        b = c * blocks_per_core + k
        # Clamp overflow steps onto a valid block; their contribution is zeroed
        # by the in-kernel row-validity mask.
        return (jnp.minimum(b, num_blocks - 1), 0)

    in_spec = pl.BlockSpec((tile_rows, _LANE), in_map)
    out_spec = pl.BlockSpec((3, _SUBLANE, _LANE), lambda c, k: (c, 0, 0))

    kernel = _make_dice_kernel(has_weights, rows, tile_rows, blocks_per_core, need_mask)

    partials = pl.pallas_call(
        kernel,
        out_shape=jax.ShapeDtypeStruct((num_cores * 3, _SUBLANE, _LANE), jnp.float32),
        grid_spec=pltpu.PrefetchScalarGridSpec(
            num_scalar_prefetch=0,
            grid=(num_cores, blocks_per_core),
            in_specs=[in_spec] * len(slabs),
            out_specs=out_spec,
        ),
        compiler_params=pltpu.CompilerParams(
            dimension_semantics=("parallel", "arbitrary"),
        ),
    )(*slabs)

    # Final (tiny) cross-lane reduction of the per-core (3, 8, 128) partials.
    sums = partials.reshape(num_cores, 3, _SUBLANE, _LANE).sum(axis=(0, 2, 3))
    intersection = sums[0]
    union = sums[1] + sums[2] + eps
    return 1.0 - 2.0 * intersection / union


def dice_loss(pred, gt, mask, weights=None, eps=1e-6):
    """pred: (N, 1, H, W), gt: (N, 1, H, W), mask: (N, H, W), weights: (N, H, W) or None."""
    assert pred.ndim == 4, pred.ndim
    # Channel squeeze: free reshape when C == 1 (the documented layout),
    # otherwise take channel 0 like the PyTorch module.
    if pred.shape[1] == 1:
        p = pred.reshape(pred.shape[0], pred.shape[2], pred.shape[3])
        g = gt.reshape(gt.shape[0], gt.shape[2], gt.shape[3])
    else:
        p = pred[:, 0, :, :]
        g = gt[:, 0, :, :]
    assert p.shape == g.shape
    assert p.shape == mask.shape
    if weights is not None:
        assert weights.shape == mask.shape
    return _dice_loss_impl(p, g, mask, weights, eps)


def _dice_loss_ref(pred, gt, mask, weights=None, eps=1e-6):
    p = pred[:, 0, :, :].astype(jnp.float32)
    g = gt[:, 0, :, :].astype(jnp.float32)
    m = mask.astype(jnp.float32)
    if weights is not None:
        m = weights * m
    intersection = jnp.sum(p * g * m)
    union = jnp.sum(p * m) + jnp.sum(g * m) + eps
    return 1.0 - 2.0 * intersection / union


if __name__ == "__main__":
    key = jax.random.PRNGKey(0)
    k1, k2, k3, k4 = jax.random.split(key, 4)

    # Small shapes consistent with the module layout.
    N, C, H, W = 2, 1, 16, 16
    pred = jax.nn.sigmoid(jax.random.normal(k1, (N, C, H, W), jnp.float32))
    gt = (jax.random.uniform(k2, (N, C, H, W)) > 0.5).astype(jnp.float32)
    mask = (jax.random.uniform(k3, (N, H, W)) > 0.2).astype(jnp.float32)
    weights = jax.random.uniform(k4, (N, H, W), jnp.float32)

    loss = jax.block_until_ready(dice_loss(pred, gt, mask, weights))
    ref = _dice_loss_ref(pred, gt, mask, weights)
    assert float(loss) <= 1.0
    assert abs(float(loss) - float(ref)) < 1e-5, (float(loss), float(ref))

    # No-weights path.
    loss_nw = jax.block_until_ready(dice_loss(pred, gt, mask))
    ref_nw = _dice_loss_ref(pred, gt, mask)
    assert abs(float(loss_nw) - float(ref_nw)) < 1e-5, (float(loss_nw), float(ref_nw))

    # Larger heatmap: exercises multi-block grid, 2-way parallel split and the
    # ragged-tail masking path (rows = 1504, tile = 1024).
    N2, H2, W2 = 2, 300, 320
    kk1, kk2, kk3, kk4 = jax.random.split(jax.random.PRNGKey(1), 4)
    pred2 = jax.nn.sigmoid(jax.random.normal(kk1, (N2, 1, H2, W2), jnp.float32))
    gt2 = (jax.random.uniform(kk2, (N2, 1, H2, W2)) > 0.5).astype(jnp.float32)
    mask2 = (jax.random.uniform(kk3, (N2, H2, W2)) > 0.2).astype(jnp.float32)
    weights2 = jax.random.uniform(kk4, (N2, H2, W2), jnp.float32)

    loss2 = jax.block_until_ready(dice_loss(pred2, gt2, mask2, weights2))
    ref2 = _dice_loss_ref(pred2, gt2, mask2, weights2)
    assert float(loss2) <= 1.0
    assert abs(float(loss2) - float(ref2)) < 1e-4, (float(loss2), float(ref2))

    print("KERNEL_OK")
</pallas_src>

<mosaic_0001>
module attributes {stable_mosaic.version = 11 : i64} {
  func.func @kernel(%arg0: i32, %arg1: i32, %arg2: memref<8x128xf32, #tpu.memory_space<vmem>>, %arg3: memref<8x128xf32, #tpu.memory_space<vmem>>, %arg4: memref<8x128xf32, #tpu.memory_space<vmem>>, %arg5: memref<8x128xf32, #tpu.memory_space<vmem>>, %arg6: memref<3x8x128xf32, #tpu.memory_space<vmem>>) attributes {dimension_semantics = [#tpu.dimension_semantics<parallel>, #tpu.dimension_semantics<arbitrary>], iteration_bounds = array<i64: 1, 1>, scalar_prefetch = 0 : i64, scratch_operands = 0 : i64, tpu.core_type = #tpu.core_type<tc>, window_params = [{transform_indices = @transform_0, window_bounds = array<i64: 8, 128>}, {transform_indices = @transform_1, window_bounds = array<i64: 8, 128>}, {transform_indices = @transform_2, window_bounds = array<i64: 8, 128>}, {transform_indices = @transform_3, window_bounds = array<i64: 8, 128>}, {transform_indices = @transform_4, window_bounds = array<i64: 3, 8, 128>}]} {
    %c0_i32 = arith.constant 0 : i32
    %0 = arith.cmpi eq, %arg1, %c0_i32 : i32
    %1 = arith.extui %0 : i1 to i32
    %c0_i32_0 = arith.constant 0 : i32
    %2 = arith.cmpi ne, %1, %c0_i32_0 : i32
    scf.if %2 {
      %cst_26 = arith.constant 0.000000e+00 : f32
      %35 = vector.broadcast %cst_26 : f32 to vector<3x8x128xf32>
      %c0_27 = arith.constant 0 : index
      %c0_28 = arith.constant 0 : index
      %c0_29 = arith.constant 0 : index
      %36 = vector.load %arg6[%c0_27, %c0_28, %c0_29] : memref<3x8x128xf32, #tpu.memory_space<vmem>>, vector<3x8x128xf32>
      tpu.vector_store %arg6[%c0_27, %c0_28, %c0_29], %35 {strides = array<i32>} : memref<3x8x128xf32, #tpu.memory_space<vmem>>, vector<3x8x128xf32>,
    } else {
    }
    %c0 = arith.constant 0 : index
    %c0_1 = arith.constant 0 : index
    %3 = vector.load %arg2[%c0, %c0_1] : memref<8x128xf32, #tpu.memory_space<vmem>>, vector<8x128xf32>
    %c0_2 = arith.constant 0 : index
    %c0_3 = arith.constant 0 : index
    %4 = vector.load %arg3[%c0_2, %c0_3] : memref<8x128xf32, #tpu.memory_space<vmem>>, vector<8x128xf32>
    %c0_4 = arith.constant 0 : index
    %c0_5 = arith.constant 0 : index
    %5 = vector.load %arg4[%c0_4, %c0_5] : memref<8x128xf32, #tpu.memory_space<vmem>>, vector<8x128xf32>
    %c0_6 = arith.constant 0 : index
    %c0_7 = arith.constant 0 : index
    %6 = vector.load %arg5[%c0_6, %c0_7] : memref<8x128xf32, #tpu.memory_space<vmem>>, vector<8x128xf32>
    %7 = arith.mulf %5, %6 : vector<8x128xf32>
    %8 = arith.mulf %3, %7 : vector<8x128xf32>
    %9 = arith.mulf %4, %7 : vector<8x128xf32>
    %10 = arith.mulf %8, %4 : vector<8x128xf32>
    %c0_8 = arith.constant 0 : index
    %c0_9 = arith.constant 0 : index
    %c0_10 = arith.constant 0 : index
    %11 = vector.load %arg6[%c0_8, %c0_9, %c0_10] : memref<3x8x128xf32, #tpu.memory_space<vmem>>, vector<1x8x128xf32>
    %12 = vector.shape_cast %11 : vector<1x8x128xf32> to vector<8x128xf32>
    %13 = vector.shape_cast %10 : vector<8x128xf32> to vector<1x8x128xf32>
    %cst = arith.constant dense<0.000000e+00> : vector<8x128xf32>
    %14 = vector.multi_reduction <add>, %13, %cst [0] : vector<1x8x128xf32> to vector<8x128xf32>
    %15 = arith.addf %12, %14 : vector<8x128xf32>
    %c0_11 = arith.constant 0 : index
    %c0_12 = arith.constant 0 : index
    %c0_13 = arith.constant 0 : index
    %16 = vector.load %arg6[%c0_11, %c0_12, %c0_13] : memref<3x8x128xf32, #tpu.memory_space<vmem>>, vector<1x8x128xf32>
    %17 = vector.shape_cast %16 : vector<1x8x128xf32> to vector<8x128xf32>
    %18 = vector.shape_cast %15 : vector<8x128xf32> to vector<1x8x128xf32>
    tpu.vector_store %arg6[%c0_11, %c0_12, %c0_13], %18 {strides = array<i32>} : memref<3x8x128xf32, #tpu.memory_space<vmem>>, vector<1x8x128xf32>,
    %c1 = arith.constant 1 : index
    %c0_14 = arith.constant 0 : index
    %c0_15 = arith.constant 0 : index
    %19 = vector.load %arg6[%c1, %c0_14, %c0_15] : memref<3x8x128xf32, #tpu.memory_space<vmem>>, vector<1x8x128xf32>
    %20 = vector.shape_cast %19 : vector<1x8x128xf32> to vector<8x128xf32>
    %21 = vector.shape_cast %8 : vector<8x128xf32> to vector<1x8x128xf32>
    %cst_16 = arith.constant dense<0.000000e+00> : vector<8x128xf32>
    %22 = vector.multi_reduction <add>, %21, %cst_16 [0] : vector<1x8x128xf32> to vector<8x128xf32>
    %23 = arith.addf %20, %22 : vector<8x128xf32>
    %c1_17 = arith.constant 1 : index
    %c0_18 = arith.constant 0 : index
    %c0_19 = arith.constant 0 : index
    %24 = vector.load %arg6[%c1_17, %c0_18, %c0_19] : memref<3x8x128xf32, #tpu.memory_space<vmem>>, vector<1x8x128xf32>
    %25 = vector.shape_cast %24 : vector<1x8x128xf32> to vector<8x128xf32>
    %26 = vector.shape_cast %23 : vector<8x128xf32> to vector<1x8x128xf32>
    tpu.vector_store %arg6[%c1_17, %c0_18, %c0_19], %26 {strides = array<i32>} : memref<3x8x128xf32, #tpu.memory_space<vmem>>, vector<1x8x128xf32>,
    %c2 = arith.constant 2 : index
    %c0_20 = arith.constant 0 : index
    %c0_21 = arith.constant 0 : index
    %27 = vector.load %arg6[%c2, %c0_20, %c0_21] : memref<3x8x128xf32, #tpu.memory_space<vmem>>, vector<1x8x128xf32>
    %28 = vector.shape_cast %27 : vector<1x8x128xf32> to vector<8x128xf32>
    %29 = vector.shape_cast %9 : vector<8x128xf32> to vector<1x8x128xf32>
    %cst_22 = arith.constant dense<0.000000e+00> : vector<8x128xf32>
    %30 = vector.multi_reduction <add>, %29, %cst_22 [0] : vector<1x8x128xf32> to vector<8x128xf32>
    %31 = arith.addf %28, %30 : vector<8x128xf32>
    %c2_23 = arith.constant 2 : index
    %c0_24 = arith.constant 0 : index
    %c0_25 = arith.constant 0 : index
    %32 = vector.load %arg6[%c2_23, %c0_24, %c0_25] : memref<3x8x128xf32, #tpu.memory_space<vmem>>, vector<1x8x128xf32>
    %33 = vector.shape_cast %32 : vector<1x8x128xf32> to vector<8x128xf32>
    %34 = vector.shape_cast %31 : vector<8x128xf32> to vector<1x8x128xf32>
    tpu.vector_store %arg6[%c2_23, %c0_24, %c0_25], %34 {strides = array<i32>} : memref<3x8x128xf32, #tpu.memory_space<vmem>>, vector<1x8x128xf32>,
    return
  }
  func.func @transform_0(%arg0: i32, %arg1: i32) -> (i32, i32) {
    %c1_i32 = arith.constant 1 : i32
    %0 = arith.muli %arg0, %c1_i32 : i32
    %1 = arith.addi %0, %arg1 : i32
    %c0_i32 = arith.constant 0 : i32
    %2 = arith.minsi %1, %c0_i32 : i32
    %c0_i32_0 = arith.constant 0 : i32
    %c0_i32_1 = arith.constant 0 : i32
    return %2, %c0_i32_0 : i32, i32
  }
  func.func @transform_1(%arg0: i32, %arg1: i32) -> (i32, i32) {
    %c1_i32 = arith.constant 1 : i32
    %0 = arith.muli %arg0, %c1_i32 : i32
    %1 = arith.addi %0, %arg1 : i32
    %c0_i32 = arith.constant 0 : i32
    %2 = arith.minsi %1, %c0_i32 : i32
    %c0_i32_0 = arith.constant 0 : i32
    %c0_i32_1 = arith.constant 0 : i32
    return %2, %c0_i32_0 : i32, i32
  }
  func.func @transform_2(%arg0: i32, %arg1: i32) -> (i32, i32) {
    %c1_i32 = arith.constant 1 : i32
    %0 = arith.muli %arg0, %c1_i32 : i32
    %1 = arith.addi %0, %arg1 : i32
    %c0_i32 = arith.constant 0 : i32
    %2 = arith.minsi %1, %c0_i32 : i32
    %c0_i32_0 = arith.constant 0 : i32
    %c0_i32_1 = arith.constant 0 : i32
    return %2, %c0_i32_0 : i32, i32
  }
  func.func @transform_3(%arg0: i32, %arg1: i32) -> (i32, i32) {
    %c1_i32 = arith.constant 1 : i32
    %0 = arith.muli %arg0, %c1_i32 : i32
    %1 = arith.addi %0, %arg1 : i32
    %c0_i32 = arith.constant 0 : i32
    %2 = arith.minsi %1, %c0_i32 : i32
    %c0_i32_0 = arith.constant 0 : i32
    %c0_i32_1 = arith.constant 0 : i32
    return %2, %c0_i32_0 : i32, i32
  }
  func.func @transform_4(%arg0: i32, %arg1: i32) -> (i32, i32, i32) {
    %c0_i32 = arith.constant 0 : i32
    %c0_i32_0 = arith.constant 0 : i32
    %c0_i32_1 = arith.constant 0 : i32
    return %arg0, %c0_i32, %c0_i32_0 : i32, i32, i32
  }
}

</mosaic_0001>

<llo_original>
// kernel: _dice_loss_impl.1
$region0: #{_dice_loss_impl.1}
  #allocation0 [shape = 'u32[]', space=smem, size = 0x4, offset = 0x4, fixed_abs, tag = 'smem constant byte address 0x4 - core index']
  #allocation1 [shape = 'u32[144,128]{1,0:T(1,128)}', space=vmem, size = 0x12000, scoped, tag = 'internal scratch']
  %s0 = inlined_call_operand.vmem [shape: f32[8,128], index: 0, kind: input, shape index: {}]
  %s1 = inlined_call_operand.vmem [shape: f32[8,128], index: 1, kind: input, shape index: {}]
  %s2 = inlined_call_operand.vmem [shape: f32[8,128], index: 2, kind: input, shape index: {}]
  %s3 = inlined_call_operand.vmem [shape: f32[8,128], index: 3, kind: input, shape index: {}]
  %s4 = inlined_call_operand.vmem [shape: f32[3,8,128], index: 4, kind: output, shape index: {}]
  %s5 = sld [smem:[#allocation0]]
  $region30: #{_dice_loss_impl.1} parent=0
    _
  %s7 = ssub.s32 1, %s5
  %s8 = scalar_select 0, %s7, %s5
  // Predicated region
  $region2: #{_dice_loss_impl.1} parent=0 // pred_check
    _
  $region3: #{_dice_loss_impl.1} parent=0 // pred_check_branch
    %10 = sbr.rel (0) target = $region5
  $region4: #{_dice_loss_impl.1} parent=0 // pred_region
    %s11 = sadd.s32 0, 0
    %p12 = scmp.lt.s32.totalorder %s11, 0
    %s13 = scalar_select %p12, %s11, 0
    %p14 = scmp.lt.s32.totalorder %s13, 0
    %s15 = scalar_select %p14, %s13, 0
    %s16 = smul.addr %s15, 8
    %s17 = scalar_lea.vmem %s0, %s16
    %s18 = sadd.s32 0, 0
    %p19 = scmp.lt.s32.totalorder %s18, 0
    %s20 = scalar_select %p19, %s18, 0
  $region5: #{_dice_loss_impl.1} parent=0 // pred_fallthru
    _
  // Predicated region
  $region6: #{_dice_loss_impl.1} parent=0 // pred_check
    _
  $region7: #{_dice_loss_impl.1} parent=0 // pred_check_branch
    %22 = sbr.rel (0) target = $region9
  $region8: #{_dice_loss_impl.1} parent=0 // pred_region
    %s23 = sadd.s32 0, 0
    %p24 = scmp.lt.s32.totalorder %s23, 0
    %s25 = scalar_select %p24, %s23, 0
    %p26 = scmp.lt.s32.totalorder %s25, 0
    %s27 = scalar_select %p26, %s25, 0
    %s28 = smul.addr %s27, 8
    %s29 = scalar_lea.vmem %s1, %s28
    %s30 = sadd.s32 0, 0
    %p31 = scmp.lt.s32.totalorder %s30, 0
    %s32 = scalar_select %p31, %s30, 0
  $region9: #{_dice_loss_impl.1} parent=0 // pred_fallthru
    _
  // Predicated region
  $region10: #{_dice_loss_impl.1} parent=0 // pred_check
    _
  $region11: #{_dice_loss_impl.1} parent=0 // pred_check_branch
    %34 = sbr.rel (0) target = $region13
  $region12: #{_dice_loss_impl.1} parent=0 // pred_region
    %s35 = sadd.s32 0, 0
    %p36 = scmp.lt.s32.totalorder %s35, 0
    %s37 = scalar_select %p36, %s35, 0
    %p38 = scmp.lt.s32.totalorder %s37, 0
    %s39 = scalar_select %p38, %s37, 0
    %s40 = smul.addr %s39, 8
    %s41 = scalar_lea.vmem %s2, %s40
    %s42 = sadd.s32 0, 0
    %p43 = scmp.lt.s32.totalorder %s42, 0
    %s44 = scalar_select %p43, %s42, 0
  $region13: #{_dice_loss_impl.1} parent=0 // pred_fallthru
    _
  // Predicated region
  $region14: #{_dice_loss_impl.1} parent=0 // pred_check
    _
  $region15: #{_dice_loss_impl.1} parent=0 // pred_check_branch
    %46 = sbr.rel (0) target = $region17
  $region16: #{_dice_loss_impl.1} parent=0 // pred_region
    %s47 = sadd.s32 0, 0
    %p48 = scmp.lt.s32.totalorder %s47, 0
    %s49 = scalar_select %p48, %s47, 0
    %p50 = scmp.lt.s32.totalorder %s49, 0
    %s51 = scalar_select %p50, %s49, 0
    %s52 = smul.addr %s51, 8
    %s53 = scalar_lea.vmem %s3, %s52
    %s54 = sadd.s32 0, 0
    %p55 = scmp.lt.s32.totalorder %s54, 0
    %s56 = scalar_select %p55, %s54, 0
  $region17: #{_dice_loss_impl.1} parent=0 // pred_fallthru
    _
  %s57 = sadd.s32 0, 0
  %p58 = scmp.lt.s32.totalorder %s57, 0
  %s59 = scalar_select %p58, %s57, 0
  %p60 = scmp.lt.s32.totalorder %s59, 0
  %s61 = scalar_select %p60, %s59, 0
  %s62 = smul.addr %s61, 8
  %s63 = scalar_lea.vmem %s0, %s62
  %s64 = sadd.s32 0, 0
  %p65 = scmp.lt.s32.totalorder %s64, 0
  %s66 = scalar_select %p65, %s64, 0
  %p67 = scmp.lt.s32.totalorder %s66, 0
  %s68 = scalar_select %p67, %s66, 0
  %s69 = smul.addr %s68, 8
  %s70 = scalar_lea.vmem %s1, %s69
  %s71 = sadd.s32 0, 0
  %p72 = scmp.lt.s32.totalorder %s71, 0
  %s73 = scalar_select %p72, %s71, 0
  %p74 = scmp.lt.s32.totalorder %s73, 0
  %s75 = scalar_select %p74, %s73, 0
  %s76 = smul.addr %s75, 8
  %s77 = scalar_lea.vmem %s2, %s76
  %s78 = sadd.s32 0, 0
  %p79 = scmp.lt.s32.totalorder %s78, 0
  %s80 = scalar_select %p79, %s78, 0
  %p81 = scmp.lt.s32.totalorder %s80, 0
  %s82 = scalar_select %p81, %s80, 0
  %s83 = smul.addr %s82, 8
  %s84 = scalar_lea.vmem %s3, %s83
  %s85 = sadd.s32 0, 0
  %p86 = scmp.lt.s32.totalorder %s85, 0
  %s87 = scalar_select %p86, %s85, 0
  %p88 = scmp.lt.s32.totalorder %s87, 0
  %s89 = scalar_select %p88, %s87, 0
  %s90 = smul.addr %s89, 8
  %s91 = scalar_lea.vmem %s0, %s90
  %s92 = sadd.s32 0, 0
  %p93 = scmp.lt.s32.totalorder %s92, 0
  %s94 = scalar_select %p93, %s92, 0
  %s95 = sadd.s32 0, 0
  %p96 = scmp.lt.s32.totalorder %s95, 0
  %s97 = scalar_select %p96, %s95, 0
  %p98 = scmp.lt.s32.totalorder %s97, 0
  %s99 = scalar_select %p98, %s97, 0
  %s100 = smul.addr %s99, 8
  %s101 = scalar_lea.vmem %s1, %s100
  %s102 = sadd.s32 0, 0
  %p103 = scmp.lt.s32.totalorder %s102, 0
  %s104 = scalar_select %p103, %s102, 0
  %s105 = sadd.s32 0, 0
  %p106 = scmp.lt.s32.totalorder %s105, 0
  %s107 = scalar_select %p106, %s105, 0
  %p108 = scmp.lt.s32.totalorder %s107, 0
  %s109 = scalar_select %p108, %s107, 0
  %s110 = smul.addr %s109, 8
  %s111 = scalar_lea.vmem %s2, %s110
  %s112 = sadd.s32 0, 0
  %p113 = scmp.lt.s32.totalorder %s112, 0
  %s114 = scalar_select %p113, %s112, 0
  %s115 = sadd.s32 0, 0
  %p116 = scmp.lt.s32.totalorder %s115, 0
  %s117 = scalar_select %p116, %s115, 0
  %p118 = scmp.lt.s32.totalorder %s117, 0
  %s119 = scalar_select %p118, %s117, 0
  %s120 = smul.addr %s119, 8
  %s121 = scalar_lea.vmem %s3, %s120
  %s122 = sadd.s32 0, 0
  %p123 = scmp.lt.s32.totalorder %s122, 0
  %s124 = scalar_select %p123, %s122, 0
  %p125 = scmp.eq.s32.totalorder 0, 0
  // Predicated region
  $region18: #{_dice_loss_impl.1} parent=0 // pred_check
    %p126 = pneg %p125
  $region19: #{_dice_loss_impl.1} parent=0 // pred_check_branch
    %128 = sbr.rel (%p126) target = $region21
  $region20: #{_dice_loss_impl.1} parent=0 // pred_region
    %129 = vst [vmem:[%s4] sm:$0xff] 0.0
    %130 = vst [vmem:[%s4 + $0x8] sm:$0xff] 0.0
    %131 = vst [vmem:[%s4 + $0x10] sm:$0xff] 0.0
  $region21: #{_dice_loss_impl.1} parent=0 // pred_fallthru
    _
  %v132 = vld [vmem:[%s91] sm:$0xff]
  %v133 = vld [vmem:[%s101] sm:$0xff]
  %v134 = vld [vmem:[%s111] sm:$0xff]
  %v135 = vld [vmem:[%s121] sm:$0xff]
  %v136 = vmul.f32 %v134, %v135
  %v137 = vmul.f32 %v132, %v136
  %v138 = vmul.f32 %v133, %v136
  %v139 = vmul.f32 %v137, %v133
  %v140 = vld [vmem:[%s4] sm:$0xff]
  %v141 = vadd.f32 %v139, 0.0
  %v142 = vadd.f32 %v140, %v141
  %143 = vst [vmem:[%s4] sm:$0xff] %v142
  %s144 = scalar_lea.vmem %s4, 8
  %v145 = vld [vmem:[%s144] sm:$0xff]
  %v146 = vadd.f32 %v137, 0.0
  %v147 = vadd.f32 %v145, %v146
  %148 = vst [vmem:[%s144] sm:$0xff] %v147
  %s149 = scalar_lea.vmem %s4, 16
  %v150 = vld [vmem:[%s149] sm:$0xff]
  %v151 = vadd.f32 %v138, 0.0
  %v152 = vadd.f32 %v150, %v151
  %153 = vst [vmem:[%s149] sm:$0xff] %v152
  // Predicated region
  $region22: #{_dice_loss_impl.1} parent=0 // pred_check
    _
  $region23: #{_dice_loss_impl.1} parent=0 // pred_check_branch
    %155 = sbr.rel (0) target = $region25
  $region24: #{_dice_loss_impl.1} parent=0 // pred_region
    _
  $region25: #{_dice_loss_impl.1} parent=0 // pred_fallthru
    _
  // Predicated region
  $region26: #{_dice_loss_impl.1} parent=0 // pred_check
    _
  $region27: #{_dice_loss_impl.1} parent=0 // pred_check_branch
    %157 = sbr.rel (0) target = $region29
  $region28: #{_dice_loss_impl.1} parent=0 // pred_region
    _
  $region29: #{_dice_loss_impl.1} parent=0 // pred_fallthru
    _

</llo_original>
